<compile_context>
chip_gen: v7x
topology: tpu7x:2x2x1
jax: 0.10.0
libtpu: 0.0.40
codegen_flags: <defaults>
</compile_context>

<pallas_src>
import functools
import math

import jax
import jax.numpy as jnp
from jax import lax
from jax.experimental import pallas as pl
from jax.experimental.pallas import tpu as pltpu


def _round_up(x, m):
    return ((x + m - 1) // m) * m


def _two_layer_kernel(x_ref, w1t_ref, w2_ref, o_ref, *, inv_sqrt_hidden):
    # Layer 1 on the MXU: (TB, IN) @ (IN, HID) -> (TB, HID), f32 accumulation.
    h = lax.dot_general(
        x_ref[...],
        w1t_ref[...],
        dimension_numbers=(((1,), (0,)), ((), ())),
        preferred_element_type=jnp.float32,
    )
    h = jnp.maximum(h, 0.0)

    # Fold the 1/sqrt(HID) scale into the lane-dense (1, HID) W2 row once.
    w2s = w2_ref[...].astype(jnp.float32) * inv_sqrt_hidden

    # Layer 2: contract HID to produce a lane-dense (1, TB) output row directly
    # (avoids a lane-width-1 (TB, 1) block and its masked partial stores).
    o_ref[...] = lax.dot_general(
        w2s,
        h,
        dimension_numbers=(((1,), (1,)), ((), ())),
        preferred_element_type=jnp.float32,
    ).astype(o_ref.dtype)


def _make_call(kernel, batch, input_features, hidden_features, block_batch,
               grid, vmem_limit, single_buffer_weights):
    # Grid-invariant weights: single-buffer them (their index_map is constant,
    # so they never re-DMA and double-buffering just wastes VMEM).
    weight_kwargs = (
        dict(pipeline_mode=pl.Buffered(1)) if single_buffer_weights else {}
    )
    return pl.pallas_call(
        kernel,
        out_shape=jax.ShapeDtypeStruct((1, batch), jnp.float32),
        grid_spec=pltpu.PrefetchScalarGridSpec(
            num_scalar_prefetch=0,
            grid=grid,
            in_specs=[
                # X: tiled over the batch axis (pipelined).
                pl.BlockSpec((block_batch, input_features), lambda i: (i, 0)),
                # W1T (IN, HID): resident across the whole grid.
                pl.BlockSpec((input_features, hidden_features),
                             lambda i: (0, 0), **weight_kwargs),
                # W2 as a lane-dense (1, HID) row, resident.
                pl.BlockSpec((1, hidden_features),
                             lambda i: (0, 0), **weight_kwargs),
            ],
            # Lane-dense output row: (1, TB) block of the (1, B) output.
            out_specs=pl.BlockSpec((1, block_batch), lambda i: (0, i)),
        ),
        compiler_params=pltpu.CompilerParams(
            dimension_semantics=("parallel",),
            vmem_limit_bytes=vmem_limit,
        ),
    )


def two_layer_forward(x, w1, w2, *, block_batch=None, use_bf16=False):
    """x: (B, IN); w1: (HID, IN); w2: (1, HID)  ->  (B, 1) f32."""
    batch, input_features = x.shape
    hidden_features = w1.shape[0]
    assert w1.shape == (hidden_features, input_features)
    assert w2.shape == (1, hidden_features)

    # One-time HBM-side transpose so the in-kernel contraction is canonical.
    w1t = jnp.transpose(w1)  # (IN, HID)

    in_dtype = jnp.bfloat16 if use_bf16 else x.dtype
    x_in = x.astype(in_dtype)
    w1t_in = w1t.astype(in_dtype)
    itemsize = jnp.dtype(in_dtype).itemsize

    # ---- Generation-aware VMEM budget (padded to (8, 128) tiles). ----------
    pad_in = _round_up(input_features, 128)
    pad_hid = _round_up(hidden_features, 128)

    try:
        vmem_cap = int(pltpu.get_tpu_info().vmem_capacity_bytes)
    except Exception:  # conservative fallback (matches v7x per-TC VMEM)
        vmem_cap = 64 << 20
    # Leave headroom for Mosaic internal scratch / semaphores.
    vmem_ceiling = max(vmem_cap - (12 << 20), 16 << 20)

    # Resident (single-buffered) weights.
    bytes_w1 = _round_up(input_features, 8) * pad_hid * itemsize
    bytes_w2 = 8 * pad_hid * 4
    resident = bytes_w1 + bytes_w2
    # TODO(synk): if `resident` ever exceeds `vmem_ceiling` (very large HID*IN),
    # add a trailing "arbitrary" grid axis that tiles W1T over HID and
    # accumulates the layer-2 partial sums in a VMEM scratch finalized with
    # pl.when on the last HID tile.

    # Per-batch-row VMEM cost: double-buffered X tile + live (TB, HID) hidden
    # activation + double-buffered lane-dense output row.
    per_row = 2 * pad_in * itemsize + pad_hid * 4 + 2 * 8 * 4

    if block_batch is None:
        budget = vmem_ceiling - resident - (8 << 20)
        max_rows = max(budget // per_row, 128)
        block_batch = int(min(batch, 4096, max_rows))
    block_batch = min(block_batch, batch)
    if block_batch < batch:
        # Tiled path: keep the lane-dense (1, TB) output block 128-aligned
        # (which also keeps the X sublane count a multiple of 8).
        block_batch = (block_batch // 128) * 128
        if block_batch < 128:
            block_batch = 128
        if block_batch >= batch:
            block_batch = batch
    grid = (pl.cdiv(batch, block_batch),)

    bytes_x = 2 * _round_up(block_batch, 8) * pad_in * itemsize
    bytes_h = _round_up(block_batch, 8) * pad_hid * 4
    bytes_o = 2 * 8 * _round_up(block_batch, 128) * 4
    vmem_limit = int((bytes_x + bytes_h + bytes_o + resident) * 1.25) + (4 << 20)
    vmem_limit = int(min(max(vmem_limit, 32 << 20), vmem_ceiling))

    kernel = functools.partial(
        _two_layer_kernel, inv_sqrt_hidden=1.0 / math.sqrt(hidden_features)
    )

    try:
        out_row = _make_call(kernel, batch, input_features, hidden_features,
                             block_batch, grid, vmem_limit,
                             single_buffer_weights=True)(x_in, w1t_in, w2)
    except Exception:
        # Fallback if this Pallas build rejects pipeline_mode=pl.Buffered(1);
        # identical kernel with default (double) buffering of the weights.
        out_row = _make_call(kernel, batch, input_features, hidden_features,
                             block_batch, grid, vmem_limit,
                             single_buffer_weights=False)(x_in, w1t_in, w2)

    # (1, B) row -> (B, 1) column (pure reshape, no data movement).
    return out_row.reshape(batch, 1)


def _reference(x, w1, w2, hidden_features):
    return jnp.maximum(x @ w1.T, 0.0) @ w2.T / math.sqrt(hidden_features)


if __name__ == "__main__":
    # Deterministic parameters/inputs (nn.init.normal_ -> standard normal).
    batch = 8
    input_features = 32
    hidden_features = 32

    key = jax.random.PRNGKey(0)
    kx, kw1, kw2 = jax.random.split(key, 3)
    x = jax.random.normal(kx, (batch, input_features), dtype=jnp.float32)
    w1 = jax.random.normal(kw1, (hidden_features, input_features), dtype=jnp.float32)
    w2 = jax.random.normal(kw2, (1, hidden_features), dtype=jnp.float32)

    out = jax.block_until_ready(two_layer_forward(x, w1, w2))
    ref = _reference(x, w1, w2, hidden_features)
    assert out.shape == (batch, 1)
    assert jnp.allclose(out, ref, atol=1e-4, rtol=1e-4)

    # Tiled-batch path: several 128-row grid steps including a ragged tail.
    kx2 = jax.random.fold_in(kx, 1)
    x2 = jax.random.normal(kx2, (300, input_features), dtype=jnp.float32)
    out2 = jax.block_until_ready(two_layer_forward(x2, w1, w2, block_batch=128))
    ref2 = _reference(x2, w1, w2, hidden_features)
    assert out2.shape == (300, 1)
    assert jnp.allclose(out2, ref2, atol=1e-4, rtol=1e-4)

    print("KERNEL_OK")
</pallas_src>

<mosaic_0001>
module attributes {stable_mosaic.version = 11 : i64} {
  func.func @_two_layer_kernel(%arg0: i32, %arg1: memref<8x32xf32, #tpu.memory_space<vmem>>, %arg2: memref<32x32xf32, #tpu.memory_space<vmem>>, %arg3: memref<1x32xf32, #tpu.memory_space<vmem>>, %arg4: memref<1x8xf32, #tpu.memory_space<vmem>>) attributes {dimension_semantics = [#tpu.dimension_semantics<parallel>], iteration_bounds = array<i64: 1>, scalar_prefetch = 0 : i64, scratch_operands = 0 : i64, tpu.core_type = #tpu.core_type<tc>, window_params = [{transform_indices = @transform_0, window_bounds = array<i64: 8, 32>}, {pipeline_mode = #tpu.pipeline_mode<synchronous>, transform_indices = @transform_1, window_bounds = array<i64: 32, 32>}, {pipeline_mode = #tpu.pipeline_mode<synchronous>, transform_indices = @transform_2, window_bounds = array<i64: 1, 32>}, {transform_indices = @transform_3, window_bounds = array<i64: 1, 8>}]} {
    %c0 = arith.constant 0 : index
    %c0_0 = arith.constant 0 : index
    %0 = vector.load %arg1[%c0, %c0_0] : memref<8x32xf32, #tpu.memory_space<vmem>>, vector<8x32xf32>
    %c0_1 = arith.constant 0 : index
    %c0_2 = arith.constant 0 : index
    %1 = vector.load %arg2[%c0_1, %c0_2] : memref<32x32xf32, #tpu.memory_space<vmem>>, vector<32x32xf32>
    %cst = arith.constant dense<0.000000e+00> : vector<8x32xf32>
    %2 = tpu.matmul %0, %1, %cst {dimension_numbers = #tpu.dot_dimension_numbers<[1], [0], [0], [1], [0, 0, 1, 1], [], []>} : vector<8x32xf32>, vector<32x32xf32>, vector<8x32xf32> -> vector<8x32xf32>
    %cst_3 = arith.constant 0.000000e+00 : f32
    %3 = vector.broadcast %cst_3 : f32 to vector<8x32xf32>
    %4 = arith.maximumf %2, %3 : vector<8x32xf32>
    %c0_4 = arith.constant 0 : index
    %c0_5 = arith.constant 0 : index
    %5 = vector.load %arg3[%c0_4, %c0_5] : memref<1x32xf32, #tpu.memory_space<vmem>>, vector<1x32xf32>
    %cst_6 = arith.constant 0.176776692 : f32
    %6 = vector.broadcast %cst_6 : f32 to vector<1x32xf32>
    %7 = arith.mulf %5, %6 : vector<1x32xf32>
    %cst_7 = arith.constant dense<0.000000e+00> : vector<1x8xf32>
    %8 = tpu.matmul %7, %4, %cst_7 {dimension_numbers = #tpu.dot_dimension_numbers<[1], [1], [0], [0], [0, 0, 1, 0], [], []>} : vector<1x32xf32>, vector<8x32xf32>, vector<1x8xf32> -> vector<1x8xf32>
    %c0_8 = arith.constant 0 : index
    %c0_9 = arith.constant 0 : index
    %9 = vector.load %arg4[%c0_8, %c0_9] : memref<1x8xf32, #tpu.memory_space<vmem>>, vector<1x8xf32>
    tpu.vector_store %arg4[%c0_8, %c0_9], %8 {strides = array<i32>} : memref<1x8xf32, #tpu.memory_space<vmem>>, vector<1x8xf32>,
    return
  }
  func.func @transform_0(%arg0: i32) -> (i32, i32) {
    %c0_i32 = arith.constant 0 : i32
    %c0_i32_0 = arith.constant 0 : i32
    return %arg0, %c0_i32 : i32, i32
  }
  func.func @transform_1(%arg0: i32) -> (i32, i32) {
    %c0_i32 = arith.constant 0 : i32
    %c0_i32_0 = arith.constant 0 : i32
    %c0_i32_1 = arith.constant 0 : i32
    return %c0_i32, %c0_i32_0 : i32, i32
  }
  func.func @transform_2(%arg0: i32) -> (i32, i32) {
    %c0_i32 = arith.constant 0 : i32
    %c0_i32_0 = arith.constant 0 : i32
    %c0_i32_1 = arith.constant 0 : i32
    return %c0_i32, %c0_i32_0 : i32, i32
  }
  func.func @transform_3(%arg0: i32) -> (i32, i32) {
    %c0_i32 = arith.constant 0 : i32
    %c0_i32_0 = arith.constant 0 : i32
    return %c0_i32, %arg0 : i32, i32
  }
}

module attributes {stable_mosaic.version = 11 : i64} {
  func.func @_two_layer_kernel(%arg0: i32, %arg1: memref<8x32xf32, #tpu.memory_space<vmem>>, %arg2: memref<32x32xf32, #tpu.memory_space<vmem>>, %arg3: memref<1x32xf32, #tpu.memory_space<vmem>>, %arg4: memref<1x8xf32, #tpu.memory_space<vmem>>) attributes {dimension_semantics = [#tpu.dimension_semantics<parallel>], iteration_bounds = array<i64: 1>, scalar_prefetch = 0 : i64, scratch_operands = 0 : i64, tpu.core_type = #tpu.core_type<tc>, window_params = [{transform_indices = @transform_0, window_bounds = array<i64: 8, 32>}, {pipeline_mode = #tpu.pipeline_mode<synchronous>, transform_indices = @transform_1, window_bounds = array<i64: 32, 32>}, {pipeline_mode = #tpu.pipeline_mode<synchronous>, transform_indices = @transform_2, window_bounds = array<i64: 1, 32>}, {transform_indices = @transform_3, window_bounds = array<i64: 1, 8>}]} {
    %c0 = arith.constant 0 : index
    %c0_0 = arith.constant 0 : index
    %0 = vector.load %arg1[%c0, %c0_0] : memref<8x32xf32, #tpu.memory_space<vmem>>, vector<8x32xf32>
    %c0_1 = arith.constant 0 : index
    %c0_2 = arith.constant 0 : index
    %1 = vector.load %arg2[%c0_1, %c0_2] : memref<32x32xf32, #tpu.memory_space<vmem>>, vector<32x32xf32>
    %cst = arith.constant dense<0.000000e+00> : vector<8x32xf32>
    %2 = tpu.matmul %0, %1, %cst {dimension_numbers = #tpu.dot_dimension_numbers<[1], [0], [0], [1], [0, 0, 1, 1], [], []>} : vector<8x32xf32>, vector<32x32xf32>, vector<8x32xf32> -> vector<8x32xf32>
    %cst_3 = arith.constant 0.000000e+00 : f32
    %3 = vector.broadcast %cst_3 : f32 to vector<8x32xf32>
    %4 = arith.maximumf %2, %3 : vector<8x32xf32>
    %c0_4 = arith.constant 0 : index
    %c0_5 = arith.constant 0 : index
    %5 = vector.load %arg3[%c0_4, %c0_5] : memref<1x32xf32, #tpu.memory_space<vmem>>, vector<1x32xf32>
    %cst_6 = arith.constant 0.176776692 : f32
    %6 = vector.broadcast %cst_6 : f32 to vector<1x32xf32>
    %7 = arith.mulf %5, %6 : vector<1x32xf32>
    %cst_7 = arith.constant dense<0.000000e+00> : vector<1x8xf32>
    %8 = tpu.matmul %7, %4, %cst_7 {dimension_numbers = #tpu.dot_dimension_numbers<[1], [1], [0], [0], [0, 0, 1, 0], [], []>} : vector<1x32xf32>, vector<8x32xf32>, vector<1x8xf32> -> vector<1x8xf32>
    %c0_8 = arith.constant 0 : index
    %c0_9 = arith.constant 0 : index
    %9 = vector.load %arg4[%c0_8, %c0_9] : memref<1x8xf32, #tpu.memory_space<vmem>>, vector<1x8xf32>
    tpu.vector_store %arg4[%c0_8, %c0_9], %8 {strides = array<i32>} : memref<1x8xf32, #tpu.memory_space<vmem>>, vector<1x8xf32>,
    return
  }
  func.func @transform_0(%arg0: i32) -> (i32, i32) {
    %c0_i32 = arith.constant 0 : i32
    %c0_i32_0 = arith.constant 0 : i32
    return %arg0, %c0_i32 : i32, i32
  }
  func.func @transform_1(%arg0: i32) -> (i32, i32) {
    %c0_i32 = arith.constant 0 : i32
    %c0_i32_0 = arith.constant 0 : i32
    %c0_i32_1 = arith.constant 0 : i32
    return %c0_i32, %c0_i32_0 : i32, i32
  }
  func.func @transform_2(%arg0: i32) -> (i32, i32) {
    %c0_i32 = arith.constant 0 : i32
    %c0_i32_0 = arith.constant 0 : i32
    %c0_i32_1 = arith.constant 0 : i32
    return %c0_i32, %c0_i32_0 : i32, i32
  }
  func.func @transform_3(%arg0: i32) -> (i32, i32) {
    %c0_i32 = arith.constant 0 : i32
    %c0_i32_0 = arith.constant 0 : i32
    return %c0_i32, %arg0 : i32, i32
  }
}

</mosaic_0001>

<llo_original>
// kernel: tpu_custom_call.1
$region0: #{tpu_custom_call.1}
  #allocation0 [shape = 'u32[]', space=smem, size = 0x4, offset = 0x4, fixed_abs, tag = 'smem constant byte address 0x4 - core index']
  #allocation1 [shape = 'u32[144,128]{1,0:T(1,128)}', space=vmem, size = 0x12000, scoped, tag = 'internal scratch']
  %s0 = inlined_call_operand.hbm [shape: f32[8,32], index: 0, kind: input, shape index: {}]
  %s1 = inlined_call_operand.hbm [shape: f32[32,32], index: 1, kind: input, shape index: {}]
  %s2 = inlined_call_operand.vmem [shape: f32[1,32], index: 2, kind: input, shape index: {}]
  %s3 = inlined_call_operand.hbm [shape: f32[1,8], index: 3, kind: output, shape index: {}]
  %s4 = sld [smem:[#allocation0]]
  $region30: #{tpu_custom_call.1} parent=0
    _
  %s6 = ssub.s32 1, %s4
  %s7 = scalar_select 0, %s6, %s4
  $region1: #{tpu_custom_call.1} parent=0
    #allocation2 [shape = 'u8[4096]{0}', space=vmem, size = 0x1000, scoped, tag = 'input window, operand 0, single buffered']
    #allocation3 [shape = 's32[1]{0}', space=sflag, size = 0x4, scoped, tag = 'scoped memory for tpu_custom_call.1']
    #allocation4 [shape = 's32[1]{0}', space=sflag, size = 0x4, scoped, tag = 'scoped memory for tpu_custom_call.1']
    #allocation5 [shape = 'u8[16384]{0}', space=vmem, size = 0x4000, scoped, tag = 'input window, operand 1, single buffered']
    #allocation6 [shape = 's32[1]{0}', space=sflag, size = 0x4, scoped, tag = 'scoped memory for tpu_custom_call.1']
    #allocation7 [shape = 'u8[512]{0}', space=vmem, size = 0x400, scoped, tag = 'output window, operand 0, single buffered']
    %8 = vsyncpa [#allocation3], 0
    %9 = vsyncpa [#allocation6], 0
    %10 = vsyncpa [#allocation4], 0
    // Predicated region
    $region2: #{tpu_custom_call.1} parent=1 // pred_check
      _
    $region3: #{tpu_custom_call.1} parent=1 // pred_check_branch
      %12 = sbr.rel (0) target = $region5
    $region4: #{tpu_custom_call.1} parent=1 // pred_region
      %s14 = ssub.s32 128, 128
      %15 = vsyncadd [#allocation3], %s14
      %s17 = sshll.u32 [#allocation2], 4
      %s18 = int_to_ptr.vmem [resolvable:$true] %s17
      %20 = dma.hbm_to_vmem [thread:$0]  %s0, 128, %s18, [#allocation3]
    $region5: #{tpu_custom_call.1} parent=1 // pred_fallthru
      _
    // Predicated region
    $region6: #{tpu_custom_call.1} parent=1 // pred_check
      _
    $region7: #{tpu_custom_call.1} parent=1 // pred_check_branch
      %22 = sbr.rel (0) target = $region9
    $region8: #{tpu_custom_call.1} parent=1 // pred_region
      %s24 = ssub.s32 512, 512
      %25 = vsyncadd [#allocation6], %s24
      %s26 = sshll.u32 [#allocation5], 4
      %s27 = int_to_ptr.vmem [resolvable:$true] %s26
      %32 = dma.hbm_to_vmem [thread:$0]  %s1, 512, %s27, [#allocation6], 128, 128, 8
    $region9: #{tpu_custom_call.1} parent=1 // pred_fallthru
      _
    // Predicated region
    $region10: #{tpu_custom_call.1} parent=1 // pred_check
      _
    $region11: #{tpu_custom_call.1} parent=1 // pred_check_branch
      %34 = sbr.rel (0) target = $region13
    $region12: #{tpu_custom_call.1} parent=1 // pred_region
      _
    $region13: #{tpu_custom_call.1} parent=1 // pred_fallthru
      _
    // Predicated region
    $region14: #{tpu_custom_call.1} parent=1 // pred_check
      _
    $region15: #{tpu_custom_call.1} parent=1 // pred_check_branch
      %36 = sbr.rel (0) target = $region17
    $region16: #{tpu_custom_call.1} parent=1 // pred_region
      %37 = dma.done [#allocation3], 128
    $region17: #{tpu_custom_call.1} parent=1 // pred_fallthru
      _
    // Predicated region
    $region18: #{tpu_custom_call.1} parent=1 // pred_check
      _
    $region19: #{tpu_custom_call.1} parent=1 // pred_check_branch
      %39 = sbr.rel (0) target = $region21
    $region20: #{tpu_custom_call.1} parent=1 // pred_region
      %40 = dma.done [#allocation6], 512
    $region21: #{tpu_custom_call.1} parent=1 // pred_fallthru
      _
    %v41 = vld [vmem:[#allocation2] sm:$0xff]
    %v42 = vld [vmem:[#allocation5] sm:$0xff]
    %v43 = vld [vmem:[#allocation5 + $0x8] sm:$0xff]
    %v44 = vld [vmem:[#allocation5 + $0x10] sm:$0xff]
    %v45 = vld [vmem:[#allocation5 + $0x18] sm:$0xff]
    %vm46 = vcmask 261120
    %v48 = vsel %vm46, %v41, 0
    %50 = vmatprep.subr.mxu0 0.0
    %51 = vmatpush1.msra.mxu0 %v42
    %52 = vmatprep.subr.mxu0 0.0
    %53 = vmatpush1.msra.mxu0 %v43
    %54 = vmatprep.subr.mxu0 0.0
    %55 = vmatpush1.msra.mxu0 %v44
    %56 = vmatprep.subr.mxu0 0.0
    %57 = vmatpush1.msra.mxu0 %v45
    %58 = vmatprep.subr.mxu0 0.0
    %59 = vmatpush1.msra.mxu0 0.0
    %60 = vmatprep.subr.mxu0 0.0
    %61 = vmatpush1.msra.mxu0 0.0
    %62 = vmatprep.subr.mxu0 0.0
    %63 = vmatpush1.msra.mxu0 0.0
    %64 = vmatprep.subr.mxu0 0.0
    %65 = vmatpush1.msra.mxu0 0.0
    %66 = vmatprep.subr.mxu0 0.0
    %67 = vmatpush1.msra.mxu0 0.0
    %68 = vmatprep.subr.mxu0 0.0
    %69 = vmatpush1.msra.mxu0 0.0
    %70 = vmatprep.subr.mxu0 0.0
    %71 = vmatpush1.msra.mxu0 0.0
    %72 = vmatprep.subr.mxu0 0.0
    %73 = vmatpush1.msra.mxu0 0.0
    %74 = vmatprep.subr.mxu0 0.0
    %75 = vmatpush1.msra.mxu0 0.0
    %76 = vmatprep.subr.mxu0 0.0
    %77 = vmatpush1.msra.mxu0 0.0
    %78 = vmatprep.subr.mxu0 0.0
    %79 = vmatpush1.msra.mxu0 0.0
    %80 = vmatprep.subr.mxu0 0.0
    %81 = vmatpush1.msra.mxu0 0.0
    %82 = vmatprep.subr.mxu0 0.0
    %83 = vmatpush1.msra.mxu0 0.0
    %84 = vmatprep.subr.mxu0 0.0
    %85 = vmatpush1.msra.mxu0 0.0
    %86 = vmatprep.subr.mxu0 0.0
    %87 = vmatpush1.msra.mxu0 0.0
    %88 = vmatprep.subr.mxu0 0.0
    %89 = vmatpush1.msra.mxu0 0.0
    %90 = vmatprep.subr.mxu0 0.0
    %91 = vmatpush1.msra.mxu0 0.0
    %92 = vmatprep.subr.mxu0 0.0
    %93 = vmatpush1.msra.mxu0 0.0
    %94 = vmatprep.subr.mxu0 0.0
    %95 = vmatpush1.msra.mxu0 0.0
    %96 = vmatprep.subr.mxu0 0.0
    %97 = vmatpush1.msra.mxu0 0.0
    %98 = vmatprep.subr.mxu0 0.0
    %99 = vmatpush1.msra.mxu0 0.0
    %100 = vmatprep.subr.mxu0 0.0
    %101 = vmatpush1.msra.mxu0 0.0
    %102 = vmatprep.subr.mxu0 0.0
    %103 = vmatpush1.msra.mxu0 0.0
    %104 = vmatprep.subr.mxu0 0.0
    %105 = vmatpush1.msra.mxu0 0.0
    %106 = vmatprep.subr.mxu0 0.0
    %107 = vmatpush1.msra.mxu0 0.0
    %108 = vmatprep.subr.mxu0 0.0
    %109 = vmatpush1.msra.mxu0 0.0
    %110 = vmatprep.subr.mxu0 0.0
    %111 = vmatpush1.msra.mxu0 0.0
    %112 = vmatprep.subr.mxu0 0.0
    %113 = vmatpush1.msra.mxu0 0.0
    %114 = vmatprep.mubr.f32.mxu0 0.0
    %115 = vmatmul.mubr.f32.gmra.mrb[0].mxu0 %v48
    %v116 = vpop.f32.mrb[0].mxu0
    %v117 = vadd.f32 0.0, %v116
    %v118 = vpop.f32.mrb[0].mxu0
    %119 = vdwg.mxu0
    %v120 = vmax.f32 %v117, 0.0
    %v121 = vld [vmem:[%s2] sm:$0x1]
    %v122 = vmul.f32 %v121, 0.17677669
    %v124 = vsel %vm46, %v122, 0
    %v127 = vsel %vm46, %v120, 0
    %129 = vmatprep.subr.mxu0 0.0
    %130 = vmatpush1.xpose.msra.mxu0 %v127
    %131 = vmatprep.subr.mxu0 0.0
    %132 = vmatpush1.xpose.msra.mxu0 0.0
    %133 = vmatprep.subr.mxu0 0.0
    %134 = vmatpush1.xpose.msra.mxu0 0.0
    %135 = vmatprep.subr.mxu0 0.0
    %136 = vmatpush1.xpose.msra.mxu0 0.0
    %137 = vmatprep.subr.mxu0 0.0
    %138 = vmatpush1.xpose.msra.mxu0 0.0
    %139 = vmatprep.subr.mxu0 0.0
    %140 = vmatpush1.xpose.msra.mxu0 0.0
    %141 = vmatprep.subr.mxu0 0.0
    %142 = vmatpush1.xpose.msra.mxu0 0.0
    %143 = vmatprep.subr.mxu0 0.0
    %144 = vmatpush1.xpose.msra.mxu0 0.0
    %145 = vmatprep.subr.mxu0 0.0
    %146 = vmatpush1.xpose.msra.mxu0 0.0
    %147 = vmatprep.subr.mxu0 0.0
    %148 = vmatpush1.xpose.msra.mxu0 0.0
    %149 = vmatprep.subr.mxu0 0.0
    %150 = vmatpush1.xpose.msra.mxu0 0.0
    %151 = vmatprep.subr.mxu0 0.0
    %152 = vmatpush1.xpose.msra.mxu0 0.0
    %153 = vmatprep.subr.mxu0 0.0
    %154 = vmatpush1.xpose.msra.mxu0 0.0
    %155 = vmatprep.subr.mxu0 0.0
    %156 = vmatpush1.xpose.msra.mxu0 0.0
    %157 = vmatprep.subr.mxu0 0.0
    %158 = vmatpush1.xpose.msra.mxu0 0.0
    %159 = vmatprep.subr.mxu0 0.0
    %160 = vmatpush1.xpose.msra.mxu0 0.0
    %161 = vmatprep.subr.mxu0 0.0
    %162 = vmatpush1.xpose.msra.mxu0 0.0
    %163 = vmatprep.subr.mxu0 0.0
    %164 = vmatpush1.xpose.msra.mxu0 0.0
    %165 = vmatprep.subr.mxu0 0.0
    %166 = vmatpush1.xpose.msra.mxu0 0.0
    %167 = vmatprep.subr.mxu0 0.0
    %168 = vmatpush1.xpose.msra.mxu0 0.0
    %169 = vmatprep.subr.mxu0 0.0
    %170 = vmatpush1.xpose.msra.mxu0 0.0
    %171 = vmatprep.subr.mxu0 0.0
    %172 = vmatpush1.xpose.msra.mxu0 0.0
    %173 = vmatprep.subr.mxu0 0.0
    %174 = vmatpush1.xpose.msra.mxu0 0.0
    %175 = vmatprep.subr.mxu0 0.0
    %176 = vmatpush1.xpose.msra.mxu0 0.0
    %177 = vmatprep.subr.mxu0 0.0
    %178 = vmatpush1.xpose.msra.mxu0 0.0
    %179 = vmatprep.subr.mxu0 0.0
    %180 = vmatpush1.xpose.msra.mxu0 0.0
    %181 = vmatprep.subr.mxu0 0.0
    %182 = vmatpush1.xpose.msra.mxu0 0.0
    %183 = vmatprep.subr.mxu0 0.0
    %184 = vmatpush1.xpose.msra.mxu0 0.0
    %185 = vmatprep.subr.mxu0 0.0
    %186 = vmatpush1.xpose.msra.mxu0 0.0
    %187 = vmatprep.subr.mxu0 0.0
    %188 = vmatpush1.xpose.msra.mxu0 0.0
    %189 = vmatprep.subr.mxu0 0.0
    %190 = vmatpush1.xpose.msra.mxu0 0.0
    %191 = vmatprep.subr.mxu0 0.0
    %192 = vmatpush1.xpose.msra.mxu0 0.0
    %193 = vmatprep.mubr.f32.mxu0 0.0
    %194 = vmatmul.mubr.f32.gmra.mrb[0].mxu0 %v124
    %v195 = vpop.f32.mrb[0].mxu0
    %v196 = vadd.f32 0.0, %v195
    %v197 = vpop.f32.mrb[0].mxu0
    %198 = vdwg.mxu0
    %vm199 = vcmask 57344
    %200 = vst.msk [vmem:[#allocation7] sm:$0x1] %vm199, %v196
    // Predicated region
    $region22: #{tpu_custom_call.1} parent=1 // pred_check
      _
    $region23: #{tpu_custom_call.1} parent=1 // pred_check_branch
      %202 = sbr.rel (0) target = $region25
    $region24: #{tpu_custom_call.1} parent=1 // pred_region
      %s204 = ssub.s32 16, 16
      %205 = vsyncadd [#allocation4], %s204
      %s207 = sshll.u32 [#allocation7], 4
      %s208 = int_to_ptr.vmem [resolvable:$true] %s207
      %210 = dma.vmem_to_hbm [thread:$0]  %s208, 16, %s3, [#allocation4]
    $region25: #{tpu_custom_call.1} parent=1 // pred_fallthru
      _
    // Predicated region
    $region26: #{tpu_custom_call.1} parent=1 // pred_check
      _
    $region27: #{tpu_custom_call.1} parent=1 // pred_check_branch
      %212 = sbr.rel (0) target = $region29
    $region28: #{tpu_custom_call.1} parent=1 // pred_region
      %213 = dma.done [#allocation4], 16
    $region29: #{tpu_custom_call.1} parent=1 // pred_fallthru
      _
    %214 = vsyncpa [#allocation3], 1
    %215 = vsyncpa [#allocation6], 1
    %216 = vsyncpa [#allocation4], 1

// kernel: tpu_custom_call.1
$region0: #{tpu_custom_call.1}
  #allocation0 [shape = 'u32[]', space=smem, size = 0x4, offset = 0x4, fixed_abs, tag = 'smem constant byte address 0x4 - core index']
  #allocation1 [shape = 'u32[144,128]{1,0:T(1,128)}', space=vmem, size = 0x12000, scoped, tag = 'internal scratch']
  %s0 = inlined_call_operand.hbm [shape: f32[8,32], index: 0, kind: input, shape index: {}]
  %s1 = inlined_call_operand.hbm [shape: f32[32,32], index: 1, kind: input, shape index: {}]
  %s2 = inlined_call_operand.vmem [shape: f32[1,32], index: 2, kind: input, shape index: {}]
  %s3 = inlined_call_operand.hbm [shape: f32[1,8], index: 3, kind: output, shape index: {}]
  %s4 = sld [smem:[#allocation0]]
  $region30: #{tpu_custom_call.1} parent=0
    _
  %s6 = ssub.s32 1, %s4
  %s7 = scalar_select 0, %s6, %s4
  $region1: #{tpu_custom_call.1} parent=0
    #allocation2 [shape = 'u8[4096]{0}', space=vmem, size = 0x1000, scoped, tag = 'input window, operand 0, single buffered']
    #allocation3 [shape = 's32[1]{0}', space=sflag, size = 0x4, scoped, tag = 'scoped memory for tpu_custom_call.1']
    #allocation4 [shape = 's32[1]{0}', space=sflag, size = 0x4, scoped, tag = 'scoped memory for tpu_custom_call.1']
    #allocation5 [shape = 'u8[16384]{0}', space=vmem, size = 0x4000, scoped, tag = 'input window, operand 1, single buffered']
    #allocation6 [shape = 's32[1]{0}', space=sflag, size = 0x4, scoped, tag = 'scoped memory for tpu_custom_call.1']
    #allocation7 [shape = 'u8[512]{0}', space=vmem, size = 0x400, scoped, tag = 'output window, operand 0, single buffered']
    %8 = vsyncpa [#allocation3], 0
    %9 = vsyncpa [#allocation6], 0
    %10 = vsyncpa [#allocation4], 0
    // Predicated region
    $region2: #{tpu_custom_call.1} parent=1 // pred_check
      _
    $region3: #{tpu_custom_call.1} parent=1 // pred_check_branch
      %12 = sbr.rel (0) target = $region5
    $region4: #{tpu_custom_call.1} parent=1 // pred_region
      %s14 = ssub.s32 128, 128
      %15 = vsyncadd [#allocation3], %s14
      %s17 = sshll.u32 [#allocation2], 4
      %s18 = int_to_ptr.vmem [resolvable:$true] %s17
      %20 = dma.hbm_to_vmem [thread:$0]  %s0, 128, %s18, [#allocation3]
    $region5: #{tpu_custom_call.1} parent=1 // pred_fallthru
      _
    // Predicated region
    $region6: #{tpu_custom_call.1} parent=1 // pred_check
      _
    $region7: #{tpu_custom_call.1} parent=1 // pred_check_branch
      %22 = sbr.rel (0) target = $region9
    $region8: #{tpu_custom_call.1} parent=1 // pred_region
      %s24 = ssub.s32 512, 512
      %25 = vsyncadd [#allocation6], %s24
      %s26 = sshll.u32 [#allocation5], 4
      %s27 = int_to_ptr.vmem [resolvable:$true] %s26
      %32 = dma.hbm_to_vmem [thread:$0]  %s1, 512, %s27, [#allocation6], 128, 128, 8
    $region9: #{tpu_custom_call.1} parent=1 // pred_fallthru
      _
    // Predicated region
    $region10: #{tpu_custom_call.1} parent=1 // pred_check
      _
    $region11: #{tpu_custom_call.1} parent=1 // pred_check_branch
      %34 = sbr.rel (0) target = $region13
    $region12: #{tpu_custom_call.1} parent=1 // pred_region
      _
    $region13: #{tpu_custom_call.1} parent=1 // pred_fallthru
      _
    // Predicated region
    $region14: #{tpu_custom_call.1} parent=1 // pred_check
      _
    $region15: #{tpu_custom_call.1} parent=1 // pred_check_branch
      %36 = sbr.rel (0) target = $region17
    $region16: #{tpu_custom_call.1} parent=1 // pred_region
      %37 = dma.done [#allocation3], 128
    $region17: #{tpu_custom_call.1} parent=1 // pred_fallthru
      _
    // Predicated region
    $region18: #{tpu_custom_call.1} parent=1 // pred_check
      _
    $region19: #{tpu_custom_call.1} parent=1 // pred_check_branch
      %39 = sbr.rel (0) target = $region21
    $region20: #{tpu_custom_call.1} parent=1 // pred_region
      %40 = dma.done [#allocation6], 512
    $region21: #{tpu_custom_call.1} parent=1 // pred_fallthru
      _
    %v41 = vld [vmem:[#allocation2] sm:$0xff]
    %v42 = vld [vmem:[#allocation5] sm:$0xff]
    %v43 = vld [vmem:[#allocation5 + $0x8] sm:$0xff]
    %v44 = vld [vmem:[#allocation5 + $0x10] sm:$0xff]
    %v45 = vld [vmem:[#allocation5 + $0x18] sm:$0xff]
    %vm46 = vcmask 261120
    %v48 = vsel %vm46, %v41, 0
    %50 = vmatprep.subr.mxu0 0.0
    %51 = vmatpush1.msra.mxu0 %v42
    %52 = vmatprep.subr.mxu0 0.0
    %53 = vmatpush1.msra.mxu0 %v43
    %54 = vmatprep.subr.mxu0 0.0
    %55 = vmatpush1.msra.mxu0 %v44
    %56 = vmatprep.subr.mxu0 0.0
    %57 = vmatpush1.msra.mxu0 %v45
    %58 = vmatprep.subr.mxu0 0.0
    %59 = vmatpush1.msra.mxu0 0.0
    %60 = vmatprep.subr.mxu0 0.0
    %61 = vmatpush1.msra.mxu0 0.0
    %62 = vmatprep.subr.mxu0 0.0
    %63 = vmatpush1.msra.mxu0 0.0
    %64 = vmatprep.subr.mxu0 0.0
    %65 = vmatpush1.msra.mxu0 0.0
    %66 = vmatprep.subr.mxu0 0.0
    %67 = vmatpush1.msra.mxu0 0.0
    %68 = vmatprep.subr.mxu0 0.0
    %69 = vmatpush1.msra.mxu0 0.0
    %70 = vmatprep.subr.mxu0 0.0
    %71 = vmatpush1.msra.mxu0 0.0
    %72 = vmatprep.subr.mxu0 0.0
    %73 = vmatpush1.msra.mxu0 0.0
    %74 = vmatprep.subr.mxu0 0.0
    %75 = vmatpush1.msra.mxu0 0.0
    %76 = vmatprep.subr.mxu0 0.0
    %77 = vmatpush1.msra.mxu0 0.0
    %78 = vmatprep.subr.mxu0 0.0
    %79 = vmatpush1.msra.mxu0 0.0
    %80 = vmatprep.subr.mxu0 0.0
    %81 = vmatpush1.msra.mxu0 0.0
    %82 = vmatprep.subr.mxu0 0.0
    %83 = vmatpush1.msra.mxu0 0.0
    %84 = vmatprep.subr.mxu0 0.0
    %85 = vmatpush1.msra.mxu0 0.0
    %86 = vmatprep.subr.mxu0 0.0
    %87 = vmatpush1.msra.mxu0 0.0
    %88 = vmatprep.subr.mxu0 0.0
    %89 = vmatpush1.msra.mxu0 0.0
    %90 = vmatprep.subr.mxu0 0.0
    %91 = vmatpush1.msra.mxu0 0.0
    %92 = vmatprep.subr.mxu0 0.0
    %93 = vmatpush1.msra.mxu0 0.0
    %94 = vmatprep.subr.mxu0 0.0
    %95 = vmatpush1.msra.mxu0 0.0
    %96 = vmatprep.subr.mxu0 0.0
    %97 = vmatpush1.msra.mxu0 0.0
    %98 = vmatprep.subr.mxu0 0.0
    %99 = vmatpush1.msra.mxu0 0.0
    %100 = vmatprep.subr.mxu0 0.0
    %101 = vmatpush1.msra.mxu0 0.0
    %102 = vmatprep.subr.mxu0 0.0
    %103 = vmatpush1.msra.mxu0 0.0
    %104 = vmatprep.subr.mxu0 0.0
    %105 = vmatpush1.msra.mxu0 0.0
    %106 = vmatprep.subr.mxu0 0.0
    %107 = vmatpush1.msra.mxu0 0.0
    %108 = vmatprep.subr.mxu0 0.0
    %109 = vmatpush1.msra.mxu0 0.0
    %110 = vmatprep.subr.mxu0 0.0
    %111 = vmatpush1.msra.mxu0 0.0
    %112 = vmatprep.subr.mxu0 0.0
    %113 = vmatpush1.msra.mxu0 0.0
    %114 = vmatprep.mubr.f32.mxu0 0.0
    %115 = vmatmul.mubr.f32.gmra.mrb[0].mxu0 %v48
    %v116 = vpop.f32.mrb[0].mxu0
    %v117 = vadd.f32 0.0, %v116
    %v118 = vpop.f32.mrb[0].mxu0
    %119 = vdwg.mxu0
    %v120 = vmax.f32 %v117, 0.0
    %v121 = vld [vmem:[%s2] sm:$0x1]
    %v122 = vmul.f32 %v121, 0.17677669
    %v124 = vsel %vm46, %v122, 0
    %v127 = vsel %vm46, %v120, 0
    %129 = vmatprep.subr.mxu0 0.0
    %130 = vmatpush1.xpose.msra.mxu0 %v127
    %131 = vmatprep.subr.mxu0 0.0
    %132 = vmatpush1.xpose.msra.mxu0 0.0
    %133 = vmatprep.subr.mxu0 0.0
    %134 = vmatpush1.xpose.msra.mxu0 0.0
    %135 = vmatprep.subr.mxu0 0.0
    %136 = vmatpush1.xpose.msra.mxu0 0.0
    %137 = vmatprep.subr.mxu0 0.0
    %138 = vmatpush1.xpose.msra.mxu0 0.0
    %139 = vmatprep.subr.mxu0 0.0
    %140 = vmatpush1.xpose.msra.mxu0 0.0
    %141 = vmatprep.subr.mxu0 0.0
    %142 = vmatpush1.xpose.msra.mxu0 0.0
    %143 = vmatprep.subr.mxu0 0.0
    %144 = vmatpush1.xpose.msra.mxu0 0.0
    %145 = vmatprep.subr.mxu0 0.0
    %146 = vmatpush1.xpose.msra.mxu0 0.0
    %147 = vmatprep.subr.mxu0 0.0
    %148 = vmatpush1.xpose.msra.mxu0 0.0
    %149 = vmatprep.subr.mxu0 0.0
    %150 = vmatpush1.xpose.msra.mxu0 0.0
    %151 = vmatprep.subr.mxu0 0.0
    %152 = vmatpush1.xpose.msra.mxu0 0.0
    %153 = vmatprep.subr.mxu0 0.0
    %154 = vmatpush1.xpose.msra.mxu0 0.0
    %155 = vmatprep.subr.mxu0 0.0
    %156 = vmatpush1.xpose.msra.mxu0 0.0
    %157 = vmatprep.subr.mxu0 0.0
    %158 = vmatpush1.xpose.msra.mxu0 0.0
    %159 = vmatprep.subr.mxu0 0.0
    %160 = vmatpush1.xpose.msra.mxu0 0.0
    %161 = vmatprep.subr.mxu0 0.0
    %162 = vmatpush1.xpose.msra.mxu0 0.0
    %163 = vmatprep.subr.mxu0 0.0
    %164 = vmatpush1.xpose.msra.mxu0 0.0
    %165 = vmatprep.subr.mxu0 0.0
    %166 = vmatpush1.xpose.msra.mxu0 0.0
    %167 = vmatprep.subr.mxu0 0.0
    %168 = vmatpush1.xpose.msra.mxu0 0.0
    %169 = vmatprep.subr.mxu0 0.0
    %170 = vmatpush1.xpose.msra.mxu0 0.0
    %171 = vmatprep.subr.mxu0 0.0
    %172 = vmatpush1.xpose.msra.mxu0 0.0
    %173 = vmatprep.subr.mxu0 0.0
    %174 = vmatpush1.xpose.msra.mxu0 0.0
    %175 = vmatprep.subr.mxu0 0.0
    %176 = vmatpush1.xpose.msra.mxu0 0.0
    %177 = vmatprep.subr.mxu0 0.0
    %178 = vmatpush1.xpose.msra.mxu0 0.0
    %179 = vmatprep.subr.mxu0 0.0
    %180 = vmatpush1.xpose.msra.mxu0 0.0
    %181 = vmatprep.subr.mxu0 0.0
    %182 = vmatpush1.xpose.msra.mxu0 0.0
    %183 = vmatprep.subr.mxu0 0.0
    %184 = vmatpush1.xpose.msra.mxu0 0.0
    %185 = vmatprep.subr.mxu0 0.0
    %186 = vmatpush1.xpose.msra.mxu0 0.0
    %187 = vmatprep.subr.mxu0 0.0
    %188 = vmatpush1.xpose.msra.mxu0 0.0
    %189 = vmatprep.subr.mxu0 0.0
    %190 = vmatpush1.xpose.msra.mxu0 0.0
    %191 = vmatprep.subr.mxu0 0.0
    %192 = vmatpush1.xpose.msra.mxu0 0.0
    %193 = vmatprep.mubr.f32.mxu0 0.0
    %194 = vmatmul.mubr.f32.gmra.mrb[0].mxu0 %v124
    %v195 = vpop.f32.mrb[0].mxu0
    %v196 = vadd.f32 0.0, %v195
    %v197 = vpop.f32.mrb[0].mxu0
    %198 = vdwg.mxu0
    %vm199 = vcmask 57344
    %200 = vst.msk [vmem:[#allocation7] sm:$0x1] %vm199, %v196
    // Predicated region
    $region22: #{tpu_custom_call.1} parent=1 // pred_check
      _
    $region23: #{tpu_custom_call.1} parent=1 // pred_check_branch
      %202 = sbr.rel (0) target = $region25
    $region24: #{tpu_custom_call.1} parent=1 // pred_region
      %s204 = ssub.s32 16, 16
      %205 = vsyncadd [#allocation4], %s204
      %s207 = sshll.u32 [#allocation7], 4
      %s208 = int_to_ptr.vmem [resolvable:$true] %s207
      %210 = dma.vmem_to_hbm [thread:$0]  %s208, 16, %s3, [#allocation4]
    $region25: #{tpu_custom_call.1} parent=1 // pred_fallthru
      _
    // Predicated region
    $region26: #{tpu_custom_call.1} parent=1 // pred_check
      _
    $region27: #{tpu_custom_call.1} parent=1 // pred_check_branch
      %212 = sbr.rel (0) target = $region29
    $region28: #{tpu_custom_call.1} parent=1 // pred_region
      %213 = dma.done [#allocation4], 16
    $region29: #{tpu_custom_call.1} parent=1 // pred_fallthru
      _
    %214 = vsyncpa [#allocation3], 1
    %215 = vsyncpa [#allocation6], 1
    %216 = vsyncpa [#allocation4], 1

</llo_original>
